<compile_context>
chip_gen: v7x
topology: tpu7x:2x2x1
jax: 0.10.0
libtpu: 0.0.40
codegen_flags: <defaults>
</compile_context>

<pallas_src>
import jax
import jax.numpy as jnp
from jax.experimental import pallas as pl
from jax.experimental.pallas import tpu as pltpu


def _round_up(n, m):
    return ((n + m - 1) // m) * m


def eve_mlp_kernel(x_ref, w1_ref, b1_ref, w2_ref, b2_ref, w3_ref, b3_ref, o_ref):
    # bf16 operands feed the MXU; accumulate in f32; elementwise math stays f32.
    x = x_ref[...].astype(jnp.bfloat16)

    # Layer 1: Linear(bit_length -> 128) + ReLU
    h1 = jnp.dot(x, w1_ref[...], preferred_element_type=jnp.float32) + b1_ref[...]
    h1 = jnp.maximum(h1, 0.0)

    # Layer 2: Linear(128 -> 64) + ReLU
    h2 = jnp.dot(h1.astype(jnp.bfloat16), w2_ref[...],
                 preferred_element_type=jnp.float32) + b2_ref[...]
    h2 = jnp.maximum(h2, 0.0)

    # Layer 3: Linear(64 -> bit_length) + Sigmoid
    z = jnp.dot(h2.astype(jnp.bfloat16), w3_ref[...],
                preferred_element_type=jnp.float32) + b3_ref[...]

    # Numerically stable sigmoid: exp only sees non-positive arguments (no overflow);
    # the divide is an EUP reciprocal (its own issue slot -> essentially free here).
    ez = jnp.exp(-jnp.abs(z))                      # in (0, 1]
    num = jnp.where(z >= 0.0, 1.0, ez)
    o_ref[...] = (num * pl.reciprocal(1.0 + ez, approx=True)).astype(o_ref.dtype)


def eve_forward(x, params, *, batch_tile=512):
    """Fused 3-layer MLP forward. Works for any batch size; tiles the batch over a grid."""
    w1, b1, w2, b2, w3, b3 = params
    B, L = x.shape
    H1 = w1.shape[1]
    H2 = w2.shape[1]

    # Batch tile: multiple of 8 (sublane), capped by batch_tile; pad batch to a multiple.
    TB = min(_round_up(B, 8), _round_up(batch_tile, 8))
    Bp = _round_up(B, TB)
    xp = x if Bp == B else jnp.pad(x, ((0, Bp - B), (0, 0)))
    nb = Bp // TB

    # bf16 weights: halves weight DMA bytes and feeds the MXU at its bf16 rate.
    w1b = w1.astype(jnp.bfloat16)
    w2b = w2.astype(jnp.bfloat16)
    w3b = w3.astype(jnp.bfloat16)

    def full_spec(a):
        # Full-extent, grid-invariant 2-D block: stays resident in VMEM across grid steps.
        return pl.BlockSpec(a.shape, lambda i: (0, 0))

    flops = 2 * Bp * (L * H1 + H1 * H2 + H2 * L)
    bytes_accessed = (
        xp.size * 4 + Bp * L * 4                               # x in, out
        + (w1b.size + w2b.size + w3b.size) * 2                 # bf16 weights
        + (b1.size + b2.size + b3.size) * 4                    # f32 biases
    )

    out = pl.pallas_call(
        eve_mlp_kernel,
        out_shape=jax.ShapeDtypeStruct((Bp, L), jnp.float32),
        grid=(nb,),
        in_specs=[
            pl.BlockSpec((TB, L), lambda i: (i, 0)),
            full_spec(w1b), full_spec(b1),
            full_spec(w2b), full_spec(b2),
            full_spec(w3b), full_spec(b3),
        ],
        out_specs=pl.BlockSpec((TB, L), lambda i: (i, 0)),
        compiler_params=pltpu.CompilerParams(
            dimension_semantics=("parallel",),
        ),
        cost_estimate=pl.CostEstimate(
            flops=flops,
            transcendentals=Bp * L,           # one exp per output element
            bytes_accessed=bytes_accessed,
        ),
    )(xp, w1b, b1, w2b, b2, w3b, b3)

    return out if Bp == B else out[:B]


def eve_reference(x, params):
    """Pure-JAX reference for correctness checks."""
    w1, b1, w2, b2, w3, b3 = params
    h1 = jnp.maximum(x @ w1 + b1, 0.0)
    h2 = jnp.maximum(h1 @ w2 + b2, 0.0)
    return jax.nn.sigmoid(h2 @ w3 + b3)


def init_params(key, bit_length):
    # Deterministic init mimicking nn.Linear's uniform(-1/sqrt(fan_in), 1/sqrt(fan_in)).
    dims = [(bit_length, 128), (128, 64), (64, bit_length)]
    params = []
    for fan_in, fan_out in dims:
        kw, kb, key = jax.random.split(key, 3)
        bound = 1.0 / jnp.sqrt(fan_in)
        w = jax.random.uniform(kw, (fan_in, fan_out), jnp.float32, -bound, bound)
        b = jax.random.uniform(kb, (1, fan_out), jnp.float32, -bound, bound)
        params.extend([w, b])
    return params


if __name__ == "__main__":
    bit_length = 32

    key = jax.random.PRNGKey(0)
    kx, kp, kx2, kx3 = jax.random.split(key, 4)
    params = init_params(kp, bit_length)

    # Small single-tile case.
    x = jax.random.normal(kx, (8, bit_length), jnp.float32)
    out = eve_forward(x, params)
    jax.block_until_ready(out)
    ref = eve_reference(x, params)
    assert out.shape == (8, bit_length)
    assert bool(jnp.all((out >= 0.0) & (out <= 1.0)))
    assert bool(jnp.allclose(out, ref, atol=2e-2)), "mismatch vs pure-JAX reference"

    # Multi-step grid case (exercises the batch pipeline / index_map path).
    x2 = jax.random.normal(kx2, (24, bit_length), jnp.float32)
    out2 = eve_forward(x2, params, batch_tile=8)   # 3 grid steps of 8 rows
    jax.block_until_ready(out2)
    ref2 = eve_reference(x2, params)
    assert out2.shape == (24, bit_length)
    assert bool(jnp.all((out2 >= 0.0) & (out2 <= 1.0)))
    assert bool(jnp.allclose(out2, ref2, atol=2e-2)), "mismatch vs pure-JAX reference (tiled)"

    # Non-divisible batch (exercises the batch-padding + slice path).
    x3 = jax.random.normal(kx3, (100, bit_length), jnp.float32)
    out3 = eve_forward(x3, params, batch_tile=64)  # Bp=128, 2 grid steps, 28 padded rows
    jax.block_until_ready(out3)
    ref3 = eve_reference(x3, params)
    assert out3.shape == (100, bit_length)
    assert bool(jnp.allclose(out3, ref3, atol=2e-2)), "mismatch vs pure-JAX reference (padded)"

    print("KERNEL_OK")
</pallas_src>

<mosaic_0001>
module attributes {stable_mosaic.version = 11 : i64} {
  func.func @eve_mlp_kernel(%arg0: i32, %arg1: memref<8x32xf32, #tpu.memory_space<vmem>>, %arg2: memref<32x128xbf16, #tpu.memory_space<vmem>>, %arg3: memref<1x128xf32, #tpu.memory_space<vmem>>, %arg4: memref<128x64xbf16, #tpu.memory_space<vmem>>, %arg5: memref<1x64xf32, #tpu.memory_space<vmem>>, %arg6: memref<64x32xbf16, #tpu.memory_space<vmem>>, %arg7: memref<1x32xf32, #tpu.memory_space<vmem>>, %arg8: memref<8x32xf32, #tpu.memory_space<vmem>>) attributes {dimension_semantics = [#tpu.dimension_semantics<parallel>], iteration_bounds = array<i64: 1>, scalar_prefetch = 0 : i64, scratch_operands = 0 : i64, tpu.core_type = #tpu.core_type<tc>, window_params = [{transform_indices = @transform_0, window_bounds = array<i64: 8, 32>}, {pipeline_mode = #tpu.pipeline_mode<synchronous>, transform_indices = @transform_1, window_bounds = array<i64: 32, 128>}, {pipeline_mode = #tpu.pipeline_mode<synchronous>, transform_indices = @transform_2, window_bounds = array<i64: 1, 128>}, {pipeline_mode = #tpu.pipeline_mode<synchronous>, transform_indices = @transform_3, window_bounds = array<i64: 128, 64>}, {pipeline_mode = #tpu.pipeline_mode<synchronous>, transform_indices = @transform_4, window_bounds = array<i64: 1, 64>}, {pipeline_mode = #tpu.pipeline_mode<synchronous>, transform_indices = @transform_5, window_bounds = array<i64: 64, 32>}, {pipeline_mode = #tpu.pipeline_mode<synchronous>, transform_indices = @transform_6, window_bounds = array<i64: 1, 32>}, {transform_indices = @transform_7, window_bounds = array<i64: 8, 32>}]} {
    %c0 = arith.constant 0 : index
    %c0_0 = arith.constant 0 : index
    %0 = vector.load %arg1[%c0, %c0_0] : memref<8x32xf32, #tpu.memory_space<vmem>>, vector<8x32xf32>
    %1 = arith.truncf %0 : vector<8x32xf32> to vector<8x32xbf16>
    %c0_1 = arith.constant 0 : index
    %c0_2 = arith.constant 0 : index
    %2 = vector.load %arg2[%c0_1, %c0_2] : memref<32x128xbf16, #tpu.memory_space<vmem>>, vector<32x128xbf16>
    %cst = arith.constant dense<0.000000e+00> : vector<8x128xf32>
    %3 = tpu.matmul %1, %2, %cst {dimension_numbers = #tpu.dot_dimension_numbers<[1], [0], [0], [1], [0, 0, 1, 1], [], []>} : vector<8x32xbf16>, vector<32x128xbf16>, vector<8x128xf32> -> vector<8x128xf32>
    %c0_3 = arith.constant 0 : index
    %c0_4 = arith.constant 0 : index
    %4 = vector.load %arg3[%c0_3, %c0_4] : memref<1x128xf32, #tpu.memory_space<vmem>>, vector<1x128xf32>
    %5 = vector.broadcast %4 : vector<1x128xf32> to vector<8x128xf32>
    %6 = arith.addf %3, %5 : vector<8x128xf32>
    %cst_5 = arith.constant 0.000000e+00 : f32
    %7 = vector.broadcast %cst_5 : f32 to vector<8x128xf32>
    %8 = arith.maximumf %6, %7 : vector<8x128xf32>
    %9 = arith.truncf %8 : vector<8x128xf32> to vector<8x128xbf16>
    %c0_6 = arith.constant 0 : index
    %c0_7 = arith.constant 0 : index
    %10 = vector.load %arg4[%c0_6, %c0_7] : memref<128x64xbf16, #tpu.memory_space<vmem>>, vector<128x64xbf16>
    %cst_8 = arith.constant dense<0.000000e+00> : vector<8x64xf32>
    %11 = tpu.matmul %9, %10, %cst_8 {dimension_numbers = #tpu.dot_dimension_numbers<[1], [0], [0], [1], [0, 0, 1, 1], [], []>} : vector<8x128xbf16>, vector<128x64xbf16>, vector<8x64xf32> -> vector<8x64xf32>
    %c0_9 = arith.constant 0 : index
    %c0_10 = arith.constant 0 : index
    %12 = vector.load %arg5[%c0_9, %c0_10] : memref<1x64xf32, #tpu.memory_space<vmem>>, vector<1x64xf32>
    %13 = vector.broadcast %12 : vector<1x64xf32> to vector<8x64xf32>
    %14 = arith.addf %11, %13 : vector<8x64xf32>
    %cst_11 = arith.constant 0.000000e+00 : f32
    %15 = vector.broadcast %cst_11 : f32 to vector<8x64xf32>
    %16 = arith.maximumf %14, %15 : vector<8x64xf32>
    %17 = arith.truncf %16 : vector<8x64xf32> to vector<8x64xbf16>
    %c0_12 = arith.constant 0 : index
    %c0_13 = arith.constant 0 : index
    %18 = vector.load %arg6[%c0_12, %c0_13] : memref<64x32xbf16, #tpu.memory_space<vmem>>, vector<64x32xbf16>
    %cst_14 = arith.constant dense<0.000000e+00> : vector<8x32xf32>
    %19 = tpu.matmul %17, %18, %cst_14 {dimension_numbers = #tpu.dot_dimension_numbers<[1], [0], [0], [1], [0, 0, 1, 1], [], []>} : vector<8x64xbf16>, vector<64x32xbf16>, vector<8x32xf32> -> vector<8x32xf32>
    %c0_15 = arith.constant 0 : index
    %c0_16 = arith.constant 0 : index
    %20 = vector.load %arg7[%c0_15, %c0_16] : memref<1x32xf32, #tpu.memory_space<vmem>>, vector<1x32xf32>
    %21 = vector.broadcast %20 : vector<1x32xf32> to vector<8x32xf32>
    %22 = arith.addf %19, %21 : vector<8x32xf32>
    %23 = math.absf %22 : vector<8x32xf32>
    %cst_17 = arith.constant 0.000000e+00 : f32
    %24 = vector.broadcast %cst_17 : f32 to vector<8x32xf32>
    %25 = arith.subf %24, %23 : vector<8x32xf32>
    %26 = math.exp %25 : vector<8x32xf32>
    %cst_18 = arith.constant 0.000000e+00 : f32
    %27 = vector.broadcast %cst_18 : f32 to vector<8x32xf32>
    %28 = arith.cmpf oge, %22, %27 : vector<8x32xf32>
    %cst_19 = arith.constant 1.000000e+00 : f32
    %29 = vector.broadcast %cst_19 : f32 to vector<8x32xf32>
    %30 = arith.select %28, %29, %26 : vector<8x32xi1>, vector<8x32xf32>
    %cst_20 = arith.constant 1.000000e+00 : f32
    %31 = vector.broadcast %cst_20 : f32 to vector<8x32xf32>
    %32 = arith.addf %31, %26 : vector<8x32xf32>
    %33 = tpu.reciprocal %32 {approx = true} : vector<8x32xf32> -> vector<8x32xf32>
    %34 = arith.mulf %30, %33 : vector<8x32xf32>
    %c0_21 = arith.constant 0 : index
    %c0_22 = arith.constant 0 : index
    %35 = vector.load %arg8[%c0_21, %c0_22] : memref<8x32xf32, #tpu.memory_space<vmem>>, vector<8x32xf32>
    tpu.vector_store %arg8[%c0_21, %c0_22], %34 {strides = array<i32>} : memref<8x32xf32, #tpu.memory_space<vmem>>, vector<8x32xf32>,
    return
  }
  func.func @transform_0(%arg0: i32) -> (i32, i32) {
    %c0_i32 = arith.constant 0 : i32
    %c0_i32_0 = arith.constant 0 : i32
    return %arg0, %c0_i32 : i32, i32
  }
  func.func @transform_1(%arg0: i32) -> (i32, i32) {
    %c0_i32 = arith.constant 0 : i32
    %c0_i32_0 = arith.constant 0 : i32
    %c0_i32_1 = arith.constant 0 : i32
    return %c0_i32, %c0_i32_0 : i32, i32
  }
  func.func @transform_2(%arg0: i32) -> (i32, i32) {
    %c0_i32 = arith.constant 0 : i32
    %c0_i32_0 = arith.constant 0 : i32
    %c0_i32_1 = arith.constant 0 : i32
    return %c0_i32, %c0_i32_0 : i32, i32
  }
  func.func @transform_3(%arg0: i32) -> (i32, i32) {
    %c0_i32 = arith.constant 0 : i32
    %c0_i32_0 = arith.constant 0 : i32
    %c0_i32_1 = arith.constant 0 : i32
    return %c0_i32, %c0_i32_0 : i32, i32
  }
  func.func @transform_4(%arg0: i32) -> (i32, i32) {
    %c0_i32 = arith.constant 0 : i32
    %c0_i32_0 = arith.constant 0 : i32
    %c0_i32_1 = arith.constant 0 : i32
    return %c0_i32, %c0_i32_0 : i32, i32
  }
  func.func @transform_5(%arg0: i32) -> (i32, i32) {
    %c0_i32 = arith.constant 0 : i32
    %c0_i32_0 = arith.constant 0 : i32
    %c0_i32_1 = arith.constant 0 : i32
    return %c0_i32, %c0_i32_0 : i32, i32
  }
  func.func @transform_6(%arg0: i32) -> (i32, i32) {
    %c0_i32 = arith.constant 0 : i32
    %c0_i32_0 = arith.constant 0 : i32
    %c0_i32_1 = arith.constant 0 : i32
    return %c0_i32, %c0_i32_0 : i32, i32
  }
  func.func @transform_7(%arg0: i32) -> (i32, i32) {
    %c0_i32 = arith.constant 0 : i32
    %c0_i32_0 = arith.constant 0 : i32
    return %arg0, %c0_i32 : i32, i32
  }
}

</mosaic_0001>

<llo_original>
// kernel: tpu_custom_call.1
$region0: #{tpu_custom_call.1}
  #allocation0 [shape = 'u32[]', space=smem, size = 0x4, offset = 0x4, fixed_abs, tag = 'smem constant byte address 0x4 - core index']
  #allocation1 [shape = 'u32[144,128]{1,0:T(1,128)}', space=vmem, size = 0x12000, scoped, tag = 'internal scratch']
  %s0 = inlined_call_operand.vmem [shape: f32[8,32], index: 0, kind: input, shape index: {}]
  %s1 = inlined_call_operand.vmem [shape: bf16[32,128], index: 1, kind: input, shape index: {}]
  %s2 = inlined_call_operand.vmem [shape: f32[1,128], index: 2, kind: input, shape index: {}]
  %s3 = inlined_call_operand.vmem [shape: bf16[128,64], index: 3, kind: input, shape index: {}]
  %s4 = inlined_call_operand.vmem [shape: f32[1,64], index: 4, kind: input, shape index: {}]
  %s5 = inlined_call_operand.vmem [shape: bf16[64,32], index: 5, kind: input, shape index: {}]
  %s6 = inlined_call_operand.vmem [shape: f32[1,32], index: 6, kind: input, shape index: {}]
  %s7 = inlined_call_operand.hbm [shape: f32[8,32], index: 7, kind: output, shape index: {}]
  %s8 = sld [smem:[#allocation0]]
  $region38: #{tpu_custom_call.1} parent=0
    _
  %s10 = ssub.s32 1, %s8
  %s11 = scalar_select 0, %s10, %s8
  $region1: #{tpu_custom_call.1} parent=0
    #allocation2 [shape = 'u8[4096]{0}', space=vmem, size = 0x1000, scoped, tag = 'output window, operand 0, single buffered']
    #allocation3 [shape = 's32[1]{0}', space=sflag, size = 0x4, scoped, tag = 'scoped memory for tpu_custom_call.1']
    %12 = vsyncpa [#allocation3], 0
    // Predicated region
    $region2: #{tpu_custom_call.1} parent=1 // pred_check
      _
    $region3: #{tpu_custom_call.1} parent=1 // pred_check_branch
      %14 = sbr.rel (0) target = $region5
    $region4: #{tpu_custom_call.1} parent=1 // pred_region
      _
    $region5: #{tpu_custom_call.1} parent=1 // pred_fallthru
      _
    // Predicated region
    $region6: #{tpu_custom_call.1} parent=1 // pred_check
      _
    $region7: #{tpu_custom_call.1} parent=1 // pred_check_branch
      %16 = sbr.rel (0) target = $region9
    $region8: #{tpu_custom_call.1} parent=1 // pred_region
      _
    $region9: #{tpu_custom_call.1} parent=1 // pred_fallthru
      _
    // Predicated region
    $region10: #{tpu_custom_call.1} parent=1 // pred_check
      _
    $region11: #{tpu_custom_call.1} parent=1 // pred_check_branch
      %18 = sbr.rel (0) target = $region13
    $region12: #{tpu_custom_call.1} parent=1 // pred_region
      _
    $region13: #{tpu_custom_call.1} parent=1 // pred_fallthru
      _
    // Predicated region
    $region14: #{tpu_custom_call.1} parent=1 // pred_check
      _
    $region15: #{tpu_custom_call.1} parent=1 // pred_check_branch
      %20 = sbr.rel (0) target = $region17
    $region16: #{tpu_custom_call.1} parent=1 // pred_region
      _
    $region17: #{tpu_custom_call.1} parent=1 // pred_fallthru
      _
    // Predicated region
    $region18: #{tpu_custom_call.1} parent=1 // pred_check
      _
    $region19: #{tpu_custom_call.1} parent=1 // pred_check_branch
      %22 = sbr.rel (0) target = $region21
    $region20: #{tpu_custom_call.1} parent=1 // pred_region
      _
    $region21: #{tpu_custom_call.1} parent=1 // pred_fallthru
      _
    // Predicated region
    $region22: #{tpu_custom_call.1} parent=1 // pred_check
      _
    $region23: #{tpu_custom_call.1} parent=1 // pred_check_branch
      %24 = sbr.rel (0) target = $region25
    $region24: #{tpu_custom_call.1} parent=1 // pred_region
      _
    $region25: #{tpu_custom_call.1} parent=1 // pred_fallthru
      _
    // Predicated region
    $region26: #{tpu_custom_call.1} parent=1 // pred_check
      _
    $region27: #{tpu_custom_call.1} parent=1 // pred_check_branch
      %26 = sbr.rel (0) target = $region29
    $region28: #{tpu_custom_call.1} parent=1 // pred_region
      _
    $region29: #{tpu_custom_call.1} parent=1 // pred_fallthru
      _
    %v28 = vld [vmem:[%s0] sm:$0xff]
    %v29 = vpack.c.bf16 %v28, %v28
    %v30 = vld [vmem:[%s1] sm:$0xf]
    %v31 = vld [vmem:[%s1 + $0x4] sm:$0xf]
    %v32 = vld [vmem:[%s1 + $0x8] sm:$0xf]
    %v33 = vld [vmem:[%s1 + $0xc] sm:$0xf]
    %v34 = vld [vmem:[%s2] sm:$0x1]
    %v36 = vlaneseq
    %v37 = vshrl.u32 %v36, 7
    %v38 = vsub.s32 0, %v37
    %v39 = vrot.slane %v34, %v38
    %v45 = vunpack.c.l.b16 %v30
    %v46 = vunpack.c.l.b16 %v31
    %v47 = vunpack.c.l.b16 %v32
    %v48 = vunpack.c.l.b16 %v33
    %v49 = vpack.c.b16 %v46, %v45
    %v50 = vpack.c.b16 %v48, %v47
    %vm53 = vcmask 261120
    %v55 = vsel %vm53, %v29, 0
    %57 = vmatprep.subr.bf16.mxu0 0
    %58 = vmatpush1.bf16.msra.mxu0 %v49
    %59 = vmatprep.subr.bf16.mxu0 0
    %60 = vmatpush1.bf16.msra.mxu0 %v50
    %61 = vmatprep.subr.bf16.mxu0 0
    %62 = vmatpush1.bf16.msra.mxu0 0
    %63 = vmatprep.subr.bf16.mxu0 0
    %64 = vmatpush1.bf16.msra.mxu0 0
    %65 = vmatprep.subr.bf16.mxu0 0
    %66 = vmatpush1.bf16.msra.mxu0 0
    %67 = vmatprep.subr.bf16.mxu0 0
    %68 = vmatpush1.bf16.msra.mxu0 0
    %69 = vmatprep.subr.bf16.mxu0 0
    %70 = vmatpush1.bf16.msra.mxu0 0
    %71 = vmatprep.subr.bf16.mxu0 0
    %72 = vmatpush1.bf16.msra.mxu0 0
    %73 = vmatprep.subr.bf16.mxu0 0
    %74 = vmatpush1.bf16.msra.mxu0 0
    %75 = vmatprep.subr.bf16.mxu0 0
    %76 = vmatpush1.bf16.msra.mxu0 0
    %77 = vmatprep.subr.bf16.mxu0 0
    %78 = vmatpush1.bf16.msra.mxu0 0
    %79 = vmatprep.subr.bf16.mxu0 0
    %80 = vmatpush1.bf16.msra.mxu0 0
    %81 = vmatprep.subr.bf16.mxu0 0
    %82 = vmatpush1.bf16.msra.mxu0 0
    %83 = vmatprep.subr.bf16.mxu0 0
    %84 = vmatpush1.bf16.msra.mxu0 0
    %85 = vmatprep.subr.bf16.mxu0 0
    %86 = vmatpush1.bf16.msra.mxu0 0
    %87 = vmatprep.subr.bf16.mxu0 0
    %88 = vmatpush1.bf16.msra.mxu0 0
    %89 = vmatprep.mubr.bf16.mxu0 0
    %90 = vmatmul.mubr.bf16.gmra.mrb[0].mxu0 %v55
    %v91 = vpop.f32.mrb[0].mxu0
    %v92 = vadd.f32 %v39, %v91
    %v93 = vpop.f32.mrb[0].mxu0
    %v94 = vpop.f32.mrb[0].mxu0
    %v95 = vpop.f32.mrb[0].mxu0
    %96 = vdwg.mxu0
    %v97 = vmax.f32 %v92, 0.0
    %v98 = vpack.c.bf16 %v97, %v97
    %v99 = vld [vmem:[%s3] sm:$0xf]
    %v100 = vld [vmem:[%s3 + $0x4] sm:$0xf]
    %v101 = vld [vmem:[%s3 + $0x8] sm:$0xf]
    %v102 = vld [vmem:[%s3 + $0xc] sm:$0xf]
    %v103 = vld [vmem:[%s3 + $0x10] sm:$0xf]
    %v104 = vld [vmem:[%s3 + $0x14] sm:$0xf]
    %v105 = vld [vmem:[%s3 + $0x18] sm:$0xf]
    %v106 = vld [vmem:[%s3 + $0x1c] sm:$0xf]
    %v107 = vld [vmem:[%s3 + $0x20] sm:$0xf]
    %v108 = vld [vmem:[%s3 + $0x24] sm:$0xf]
    %v109 = vld [vmem:[%s3 + $0x28] sm:$0xf]
    %v110 = vld [vmem:[%s3 + $0x2c] sm:$0xf]
    %v111 = vld [vmem:[%s3 + $0x30] sm:$0xf]
    %v112 = vld [vmem:[%s3 + $0x34] sm:$0xf]
    %v113 = vld [vmem:[%s3 + $0x38] sm:$0xf]
    %v114 = vld [vmem:[%s3 + $0x3c] sm:$0xf]
    %v115 = vld [vmem:[%s4] sm:$0x1]
    %v117 = vlaneseq
    %v118 = vshrl.u32 %v117, 7
    %v119 = vsub.s32 0, %v118
    %v120 = vrot.slane %v115, %v119
    %v138 = vunpack.c.l.b16 %v99
    %v139 = vunpack.c.l.b16 %v100
    %v140 = vunpack.c.l.b16 %v101
    %v141 = vunpack.c.l.b16 %v102
    %v142 = vunpack.c.l.b16 %v103
    %v143 = vunpack.c.l.b16 %v104
    %v144 = vunpack.c.l.b16 %v105
    %v145 = vunpack.c.l.b16 %v106
    %v146 = vunpack.c.l.b16 %v107
    %v147 = vunpack.c.l.b16 %v108
    %v148 = vunpack.c.l.b16 %v109
    %v149 = vunpack.c.l.b16 %v110
    %v150 = vunpack.c.l.b16 %v111
    %v151 = vunpack.c.l.b16 %v112
    %v152 = vunpack.c.l.b16 %v113
    %v153 = vunpack.c.l.b16 %v114
    %v154 = vpack.c.b16 %v139, %v138
    %v155 = vpack.c.b16 %v141, %v140
    %v156 = vpack.c.b16 %v143, %v142
    %v157 = vpack.c.b16 %v145, %v144
    %v158 = vpack.c.b16 %v147, %v146
    %v159 = vpack.c.b16 %v149, %v148
    %v160 = vpack.c.b16 %v151, %v150
    %v161 = vpack.c.b16 %v153, %v152
    %170 = vmatprep.subr.bf16.mxu0 0
    %171 = vmatpush1.bf16.msra.mxu0 %v154
    %172 = vmatprep.subr.bf16.mxu0 0
    %173 = vmatpush1.bf16.msra.mxu0 %v155
    %174 = vmatprep.subr.bf16.mxu0 0
    %175 = vmatpush1.bf16.msra.mxu0 %v156
    %176 = vmatprep.subr.bf16.mxu0 0
    %177 = vmatpush1.bf16.msra.mxu0 %v157
    %178 = vmatprep.subr.bf16.mxu0 0
    %179 = vmatpush1.bf16.msra.mxu0 %v158
    %180 = vmatprep.subr.bf16.mxu0 0
    %181 = vmatpush1.bf16.msra.mxu0 %v159
    %182 = vmatprep.subr.bf16.mxu0 0
    %183 = vmatpush1.bf16.msra.mxu0 %v160
    %184 = vmatprep.subr.bf16.mxu0 0
    %185 = vmatpush1.bf16.msra.mxu0 %v161
    %186 = vmatprep.subr.bf16.mxu0 0
    %187 = vmatpush1.bf16.msra.mxu0 0
    %188 = vmatprep.subr.bf16.mxu0 0
    %189 = vmatpush1.bf16.msra.mxu0 0
    %190 = vmatprep.subr.bf16.mxu0 0
    %191 = vmatpush1.bf16.msra.mxu0 0
    %192 = vmatprep.subr.bf16.mxu0 0
    %193 = vmatpush1.bf16.msra.mxu0 0
    %194 = vmatprep.subr.bf16.mxu0 0
    %195 = vmatpush1.bf16.msra.mxu0 0
    %196 = vmatprep.subr.bf16.mxu0 0
    %197 = vmatpush1.bf16.msra.mxu0 0
    %198 = vmatprep.subr.bf16.mxu0 0
    %199 = vmatpush1.bf16.msra.mxu0 0
    %200 = vmatprep.subr.bf16.mxu0 0
    %201 = vmatpush1.bf16.msra.mxu0 0
    %202 = vmatprep.mubr.bf16.mxu0 0
    %203 = vmatmul.mubr.bf16.gmra.mrb[0].mxu0 %v98
    %v204 = vpop.f32.mrb[0].mxu0
    %v205 = vadd.f32 %v120, %v204
    %v206 = vpop.f32.mrb[0].mxu0
    %v207 = vpop.f32.mrb[0].mxu0
    %v208 = vpop.f32.mrb[0].mxu0
    %209 = vdwg.mxu0
    %v210 = vmax.f32 %v205, 0.0
    %v211 = vpack.c.bf16 %v210, %v210
    %v212 = vld [vmem:[%s5] sm:$0xf]
    %v213 = vld [vmem:[%s5 + $0x4] sm:$0xf]
    %v214 = vld [vmem:[%s5 + $0x8] sm:$0xf]
    %v215 = vld [vmem:[%s5 + $0xc] sm:$0xf]
    %v216 = vld [vmem:[%s5 + $0x10] sm:$0xf]
    %v217 = vld [vmem:[%s5 + $0x14] sm:$0xf]
    %v218 = vld [vmem:[%s5 + $0x18] sm:$0xf]
    %v219 = vld [vmem:[%s5 + $0x1c] sm:$0xf]
    %v220 = vld [vmem:[%s6] sm:$0x1]
    %v222 = vlaneseq
    %v223 = vshrl.u32 %v222, 7
    %v224 = vsub.s32 0, %v223
    %v225 = vrot.slane %v220, %v224
    %v235 = vunpack.c.l.b16 %v212
    %v236 = vunpack.c.l.b16 %v213
    %v237 = vunpack.c.l.b16 %v214
    %v238 = vunpack.c.l.b16 %v215
    %v239 = vunpack.c.l.b16 %v216
    %v240 = vunpack.c.l.b16 %v217
    %v241 = vunpack.c.l.b16 %v218
    %v242 = vunpack.c.l.b16 %v219
    %v243 = vpack.c.b16 %v236, %v235
    %v244 = vpack.c.b16 %v238, %v237
    %v245 = vpack.c.b16 %v240, %v239
    %v246 = vpack.c.b16 %v242, %v241
    %vm251 = vcmask 523264
    %v253 = vsel %vm251, %v211, 0
    %255 = vmatprep.subr.bf16.mxu0 0
    %256 = vmatpush1.bf16.msra.mxu0 %v243
    %257 = vmatprep.subr.bf16.mxu0 0
    %258 = vmatpush1.bf16.msra.mxu0 %v244
    %259 = vmatprep.subr.bf16.mxu0 0
    %260 = vmatpush1.bf16.msra.mxu0 %v245
    %261 = vmatprep.subr.bf16.mxu0 0
    %262 = vmatpush1.bf16.msra.mxu0 %v246
    %263 = vmatprep.subr.bf16.mxu0 0
    %264 = vmatpush1.bf16.msra.mxu0 0
    %265 = vmatprep.subr.bf16.mxu0 0
    %266 = vmatpush1.bf16.msra.mxu0 0
    %267 = vmatprep.subr.bf16.mxu0 0
    %268 = vmatpush1.bf16.msra.mxu0 0
    %269 = vmatprep.subr.bf16.mxu0 0
    %270 = vmatpush1.bf16.msra.mxu0 0
    %271 = vmatprep.subr.bf16.mxu0 0
    %272 = vmatpush1.bf16.msra.mxu0 0
    %273 = vmatprep.subr.bf16.mxu0 0
    %274 = vmatpush1.bf16.msra.mxu0 0
    %275 = vmatprep.subr.bf16.mxu0 0
    %276 = vmatpush1.bf16.msra.mxu0 0
    %277 = vmatprep.subr.bf16.mxu0 0
    %278 = vmatpush1.bf16.msra.mxu0 0
    %279 = vmatprep.subr.bf16.mxu0 0
    %280 = vmatpush1.bf16.msra.mxu0 0
    %281 = vmatprep.subr.bf16.mxu0 0
    %282 = vmatpush1.bf16.msra.mxu0 0
    %283 = vmatprep.subr.bf16.mxu0 0
    %284 = vmatpush1.bf16.msra.mxu0 0
    %285 = vmatprep.subr.bf16.mxu0 0
    %286 = vmatpush1.bf16.msra.mxu0 0
    %287 = vmatprep.mubr.bf16.mxu0 0
    %288 = vmatmul.mubr.bf16.gmra.mrb[0].mxu0 %v253
    %v289 = vpop.f32.mrb[0].mxu0
    %v290 = vadd.f32 %v225, %v289
    %v291 = vpop.f32.mrb[0].mxu0
    %v292 = vpop.f32.mrb[0].mxu0
    %v293 = vpop.f32.mrb[0].mxu0
    %294 = vdwg.mxu0
    %v295 = vand.u32 2147483647, %v290
    %v296 = vsub.f32 0.0, %v295
    %v297 = vmul.f32 %v296, 1.442695
    %v298 = vpow.pop %v297
    %vm299 = vcmp.ge.f32.partialorder %v290, 0.0
    %v300 = vsel %vm299, 1.0, %v298
    %v301 = vadd.f32 %v298, 1.0
    %v302 = vrcp.pop %v301
    %v303 = vmul.f32 %v300, %v302
    %304 = vst.msk [vmem:[#allocation2] sm:$0xff] %vm53, %v303
    // Predicated region
    $region30: #{tpu_custom_call.1} parent=1 // pred_check
      _
    $region31: #{tpu_custom_call.1} parent=1 // pred_check_branch
      %306 = sbr.rel (0) target = $region33
    $region32: #{tpu_custom_call.1} parent=1 // pred_region
      %s308 = ssub.s32 128, 128
      %309 = vsyncadd [#allocation3], %s308
      %s311 = sshll.u32 [#allocation2], 4
      %s312 = int_to_ptr.vmem [resolvable:$true] %s311
      %314 = dma.vmem_to_hbm [thread:$0]  %s312, 128, %s7, [#allocation3]
    $region33: #{tpu_custom_call.1} parent=1 // pred_fallthru
      _
    // Predicated region
    $region34: #{tpu_custom_call.1} parent=1 // pred_check
      _
    $region35: #{tpu_custom_call.1} parent=1 // pred_check_branch
      %316 = sbr.rel (0) target = $region37
    $region36: #{tpu_custom_call.1} parent=1 // pred_region
      %317 = dma.done [#allocation3], 128
    $region37: #{tpu_custom_call.1} parent=1 // pred_fallthru
      _
    %318 = vsyncpa [#allocation3], 1

</llo_original>
